<compile_context>
chip_gen: v6e
topology: v6e:2x2x1
jax: 0.10.0
libtpu: 0.0.40
codegen_flags: <defaults>
</compile_context>

<pallas_src>
import functools

import jax
import jax.numpy as jnp
from jax.experimental import pallas as pl
from jax.experimental.pallas import tpu as pltpu


def _upsample_kernel_fullrow(x_ref, e_ref, o_ref):
    # x_ref: (Rb, W)       input row chunk
    # e_ref: (W, s*W*s)    one-hot expansion incl. the s-fold lane duplication
    # o_ref: (Rb, s*W*s)   flattened output rows
    # Single full-block store; used only when W*s is not a multiple of 128 (small
    # early-decoder stages) where the extra MXU work is negligible.
    o_ref[...] = jnp.dot(
        x_ref[...], e_ref[...], preferred_element_type=jnp.float32
    ).astype(o_ref.dtype)


def _upsample_kernel_chunked(x_ref, e_ref, o_ref, *, s, wc, n_chunks):
    # x_ref: (Rb, W)       input row chunk (W = wc * n_chunks)
    # e_ref: (wc, wc*s)    shared block-diagonal chunk of the one-hot expansion
    # o_ref: (Rb, W*s*s)   flattened output rows
    # All store offsets/widths are multiples of 128 lanes in this path (guaranteed
    # by the wrapper) -> unmasked lane-dense stores.
    e = e_ref[...]
    ws = wc * n_chunks * s  # == W * s
    for c in range(n_chunks):            # static & tiny -> unrolled
        rep = jnp.dot(
            x_ref[:, c * wc:(c + 1) * wc], e,
            preferred_element_type=jnp.float32,
        ).astype(o_ref.dtype)            # rep[r, k] = x[r, c*wc + k//s]
        for di in range(s):              # static & tiny -> unrolled
            start = di * ws + c * wc * s
            o_ref[:, start:start + wc * s] = rep


def _pick_col_chunk(W, s):
    """Chunk width Wc for the block-diagonal expansion (Wc*s multiple of 128)."""
    for cand in (256, 128):
        if cand < W and W % cand == 0 and (cand * s) % 128 == 0:
            return cand
    return W


def _pick_row_block(R, out_row_bytes, target_bytes=8 << 20):
    """Row chunk Rb (multiple of 8) giving ~target_bytes output tiles and grid >= 2."""
    max_rows = max(8, (target_bytes // max(out_row_bytes, 1)) // 8 * 8)
    if R <= 8:
        return 8  # tiny problem: one (padded) block
    # Prefer an exact divisor of R (no padding, no output slice copy), as large as
    # possible but <= max_rows and <= R/2 so the grid has >= 2 steps (v7x megacore).
    limit = min(max_rows, (R // 2 // 8) * 8) if R >= 16 else max_rows
    best = None
    for cand in range(8, limit + 1, 8):
        if R % cand == 0:
            best = cand
    if best is not None:
        return best
    # No clean multiple-of-8 divisor: pad rows up to grid*Rb and slice the result.
    return min(max_rows, ((R + 1) // 2 + 7) // 8 * 8)


def upsample(x, scale_factor=2, mode="nearest"):
    if mode != "nearest":
        # TODO(synk): bilinear / bicubic interpolate modes are not implemented.
        raise NotImplementedError(mode)
    s = int(scale_factor)
    if s != scale_factor:
        # TODO(synk): non-integer scale factors are not implemented.
        raise NotImplementedError(scale_factor)
    if s == 1:
        return x
    if not jnp.issubdtype(x.dtype, jnp.floating):
        # TODO(synk): integer dtypes (not used by SalGAN) are not implemented.
        raise NotImplementedError(x.dtype)

    N, C, H, W = x.shape
    R = N * C * H
    itemsize = jnp.dtype(x.dtype).itemsize

    # Metadata-only reshape: rows are (n, c, i), columns are j.
    x2 = x.reshape(R, W)

    # Choose path + expansion matrix.
    full_row = (W * s) % 128 != 0
    if full_row:
        # E_full[j, m] = 1 iff (m % (W*s)) // s == j   (encodes the s lane copies).
        m_idx = jnp.arange(s * W * s, dtype=jnp.int32)[None, :]
        j_idx = jnp.arange(W, dtype=jnp.int32)[:, None]
        expand = ((m_idx % (W * s)) // s == j_idx).astype(x.dtype)
        kernel = _upsample_kernel_fullrow
        e_spec = pl.BlockSpec((W, s * W * s), lambda r: (0, 0))
    else:
        wc = _pick_col_chunk(W, s)
        n_chunks = W // wc
        # E_small[j, k] = 1 iff k // s == j.
        k_idx = jnp.arange(wc * s, dtype=jnp.int32)[None, :]
        j_idx = jnp.arange(wc, dtype=jnp.int32)[:, None]
        expand = (k_idx // s == j_idx).astype(x.dtype)
        kernel = functools.partial(
            _upsample_kernel_chunked, s=s, wc=wc, n_chunks=n_chunks
        )
        e_spec = pl.BlockSpec((wc, wc * s), lambda r: (0, 0))

    out_cols = s * W * s
    out_row_bytes = out_cols * itemsize
    Rb = _pick_row_block(R, out_row_bytes)
    grid_len = pl.cdiv(R, Rb)
    R_pad = grid_len * Rb
    if R_pad != R:
        # Rare path (awkward row counts): zero-pad rows; output is sliced below.
        x2 = jnp.pad(x2, ((0, R_pad - R), (0, 0)))

    # Explicit scoped-VMEM budget: double-buffered input + output tiles + resident E.
    in_tile_bytes = Rb * W * itemsize
    out_tile_bytes = Rb * out_cols * itemsize
    e_bytes = int(expand.size) * itemsize
    vmem_need = 2 * (in_tile_bytes + out_tile_bytes) + 2 * e_bytes + (4 << 20)
    vmem_limit = int(min(max(vmem_need, 32 << 20), 64 << 20))

    blocked = pl.pallas_call(
        kernel,
        out_shape=jax.ShapeDtypeStruct((R_pad, out_cols), x.dtype),
        grid_spec=pltpu.PrefetchScalarGridSpec(
            num_scalar_prefetch=0,
            grid=(grid_len,),
            in_specs=[
                pl.BlockSpec((Rb, W), lambda r: (r, 0)),
                e_spec,  # constant block index -> fetched once, stays resident
            ],
            out_specs=pl.BlockSpec((Rb, out_cols), lambda r: (r, 0)),
        ),
        compiler_params=pltpu.CompilerParams(
            dimension_semantics=("parallel",),
            vmem_limit_bytes=vmem_limit,
        ),
    )(x2, expand)

    if R_pad != R:
        blocked = blocked[:R]

    # Free row-major reshape:
    #   blocked[(n*C+c)*H + i, di*W*s + j*s + dj] -> out[n, c, i*s+di, j*s+dj]
    return blocked.reshape(N, C, H * s, W * s)


if __name__ == "__main__":
    def _ref(x, s):
        return jnp.repeat(jnp.repeat(x, s, axis=2), s, axis=3)

    scale = 2

    # 1) Small NCHW conv-feature-like input (W*s < 128 -> full-row one-hot path).
    x1 = jax.random.normal(jax.random.PRNGKey(0), (2, 4, 16, 16), dtype=jnp.float32)
    y1 = jax.block_until_ready(upsample(x1, scale_factor=scale, mode="nearest"))
    assert y1.shape == (2, 4, 32, 32), y1.shape
    assert y1.dtype == x1.dtype
    assert jnp.allclose(y1, _ref(x1, scale)), "mismatch (full-row path)"

    # 2) Lane-aligned stage (W*s multiple of 128 -> chunked, unmasked-store path).
    x2 = jax.random.normal(jax.random.PRNGKey(1), (1, 4, 8, 128), dtype=jnp.float32)
    y2 = jax.block_until_ready(upsample(x2, scale_factor=scale, mode="nearest"))
    assert y2.shape == (1, 4, 16, 256), y2.shape
    assert jnp.allclose(y2, _ref(x2, scale)), "mismatch (chunked path)"

    # 3) Wide stage exercising the block-diagonal E chunking (n_chunks == 2).
    x3 = jax.random.normal(jax.random.PRNGKey(2), (1, 2, 8, 256), dtype=jnp.float32)
    y3 = jax.block_until_ready(upsample(x3, scale_factor=scale, mode="nearest"))
    assert y3.shape == (1, 2, 16, 512), y3.shape
    assert jnp.allclose(y3, _ref(x3, scale)), "mismatch (2-chunk path)"

    print("KERNEL_OK")
</pallas_src>

<mosaic_0001>
module attributes {stable_mosaic.version = 11 : i64} {
  func.func @_upsample_kernel_fullrow(%arg0: i32, %arg1: memref<64x16xf32, #tpu.memory_space<vmem>>, %arg2: memref<16x64xf32, #tpu.memory_space<vmem>>, %arg3: memref<64x64xf32, #tpu.memory_space<vmem>>) attributes {dimension_semantics = [#tpu.dimension_semantics<parallel>], iteration_bounds = array<i64: 2>, scalar_prefetch = 0 : i64, scratch_operands = 0 : i64, tpu.core_type = #tpu.core_type<tc>, window_params = [{transform_indices = @transform_0, window_bounds = array<i64: 64, 16>}, {pipeline_mode = #tpu.pipeline_mode<synchronous>, transform_indices = @transform_1, window_bounds = array<i64: 16, 64>}, {transform_indices = @transform_2, window_bounds = array<i64: 64, 64>}]} {
    %c0 = arith.constant 0 : index
    %c0_0 = arith.constant 0 : index
    %0 = vector.load %arg1[%c0, %c0_0] : memref<64x16xf32, #tpu.memory_space<vmem>>, vector<64x16xf32>
    %c0_1 = arith.constant 0 : index
    %c0_2 = arith.constant 0 : index
    %1 = vector.load %arg2[%c0_1, %c0_2] : memref<16x64xf32, #tpu.memory_space<vmem>>, vector<16x64xf32>
    %cst = arith.constant dense<0.000000e+00> : vector<64x64xf32>
    %2 = tpu.matmul %0, %1, %cst {dimension_numbers = #tpu.dot_dimension_numbers<[1], [0], [0], [1], [0, 0, 1, 1], [], []>} : vector<64x16xf32>, vector<16x64xf32>, vector<64x64xf32> -> vector<64x64xf32>
    %c0_3 = arith.constant 0 : index
    %c0_4 = arith.constant 0 : index
    %3 = vector.load %arg3[%c0_3, %c0_4] : memref<64x64xf32, #tpu.memory_space<vmem>>, vector<64x64xf32>
    tpu.vector_store %arg3[%c0_3, %c0_4], %2 {strides = array<i32>} : memref<64x64xf32, #tpu.memory_space<vmem>>, vector<64x64xf32>,
    return
  }
  func.func @transform_0(%arg0: i32) -> (i32, i32) {
    %c0_i32 = arith.constant 0 : i32
    %c0_i32_0 = arith.constant 0 : i32
    return %arg0, %c0_i32 : i32, i32
  }
  func.func @transform_1(%arg0: i32) -> (i32, i32) {
    %c0_i32 = arith.constant 0 : i32
    %c0_i32_0 = arith.constant 0 : i32
    %c0_i32_1 = arith.constant 0 : i32
    return %c0_i32, %c0_i32_0 : i32, i32
  }
  func.func @transform_2(%arg0: i32) -> (i32, i32) {
    %c0_i32 = arith.constant 0 : i32
    %c0_i32_0 = arith.constant 0 : i32
    return %arg0, %c0_i32 : i32, i32
  }
}

</mosaic_0001>

<llo_original>
// kernel: tpu_custom_call.1
$region0: #{tpu_custom_call.1}
  #allocation0 [shape = 'u32[]', space=smem, size = 0x4, offset = 0x4, fixed_abs, tag = 'smem constant byte address 0x4 - core index']
  #allocation1 [shape = 'u32[144,128]{1,0:T(1,128)}', space=vmem, size = 0x12000, scoped, tag = 'internal scratch']
  %s0 = inlined_call_operand.vmem [shape: f32[128,16], index: 0, kind: input, shape index: {}]
  %s1 = inlined_call_operand.vmem [shape: f32[16,64], index: 1, kind: input, shape index: {}]
  %s2 = inlined_call_operand.vmem [shape: f32[128,64], index: 2, kind: output, shape index: {}]
  %s3 = sld [smem:[#allocation0]]
  $region41: #{tpu_custom_call.1} parent=0
    _
  %s5 = ssub.s32 1, %s3
  %s6 = scalar_select 0, %s5, %s3
  loop: start=0, step=1, limit=4
  $region2: #{tpu_custom_call.1} parent=0 // loop_pre_header
    _
  $region3: #{tpu_custom_call.1} parent=0 // loop_header
    %s8 = sphi 0, %s12
    %p9 = scmp.ge.s32.totalorder %s8, 4
    %s18 = sphi 0, %s20
    %s21 = sphi 0, %s18
    %s22 = sphi 0, %s21
    %s38 = sphi 0, %s22
    %s42 = sphi 0, %s42
    %s44 = sphi 0, %s42
    %s45 = sphi 0, %s44
    %s59 = sphi 0, %s45
    %s65 = sphi 0, %s67
    %s68 = sphi 0, %s65
    %s69 = sphi 0, %s68
    %s85 = sphi 0, %s69
  $region4: #{tpu_custom_call.1} parent=0 // loop_header_branch
    %11 = sbr.rel (%p9) target = $region8
  $region5: #{tpu_custom_call.1} parent=0 // loop_body
    %s13 = ssub.s32 %s8, 1
    %s14 = ssub.s32 %s8, 2
    %s15 = sadd.s32 %s8, 1
    %s16 = ssub.s32 %s8, %s15
    %p17 = scmp.eq.s32.totalorder %s16, 0
    %s19 = sadd.s32 %s18, 1
    %s20 = scalar_select %p17, %s18, %s19
    %p23 = pneg %p17
    %p24 = scmp.eq.s32.totalorder %s8, 1
    %p25 = por %p23, %p24
    %p26 = scmp.ne.s32.totalorder %s18, %s21
    %p27 = scmp.eq.s32.totalorder %s8, 0
    %p28 = por %p26, %p27
    %p29 = scmp.ne.s32.totalorder %s18, %s21
    %p30 = scmp.eq.s32.totalorder %s13, 1
    %p31 = por %p29, %p30
    %p32 = scmp.ne.s32.totalorder %s21, %s22
    %p33 = scmp.eq.s32.totalorder %s13, 0
    %p34 = por %p32, %p33
    %p35 = scmp.ne.s32.totalorder %s21, %s22
    %p36 = scmp.eq.s32.totalorder %s14, 1
    %p37 = por %p35, %p36
    %p39 = scmp.ne.s32.totalorder %s22, %s38
    %p40 = scmp.eq.s32.totalorder %s14, 0
    %p41 = por %p39, %p40
    %s43 = sadd.s32 %s42, 1
    %p46 = scmp.eq.s32.totalorder %s8, 1
    %p47 = scmp.ne.s32.totalorder %s42, %s44
    %p48 = scmp.eq.s32.totalorder %s8, 0
    %p49 = por %p47, %p48
    %p50 = scmp.ne.s32.totalorder %s42, %s44
    %p51 = scmp.eq.s32.totalorder %s13, 1
    %p52 = por %p50, %p51
    %p53 = scmp.ne.s32.totalorder %s44, %s45
    %p54 = scmp.eq.s32.totalorder %s13, 0
    %p55 = por %p53, %p54
    %p56 = scmp.ne.s32.totalorder %s44, %s45
    %p57 = scmp.eq.s32.totalorder %s14, 1
    %p58 = por %p56, %p57
    %p60 = scmp.ne.s32.totalorder %s45, %s59
    %p61 = scmp.eq.s32.totalorder %s14, 0
    %p62 = por %p60, %p61
    %s63 = ssub.s32 %s8, %s15
    %p64 = scmp.eq.s32.totalorder %s63, 0
    %s66 = sadd.s32 %s65, 1
    %s67 = scalar_select %p64, %s65, %s66
    %p70 = pneg %p64
    %p71 = scmp.eq.s32.totalorder %s8, 1
    %p72 = por %p70, %p71
    %p73 = scmp.ne.s32.totalorder %s65, %s68
    %p74 = scmp.eq.s32.totalorder %s8, 0
    %p75 = por %p73, %p74
    %p76 = scmp.ne.s32.totalorder %s65, %s68
    %p77 = scmp.eq.s32.totalorder %s13, 1
    %p78 = por %p76, %p77
    %p79 = scmp.ne.s32.totalorder %s68, %s69
    %p80 = scmp.eq.s32.totalorder %s13, 0
    %p81 = por %p79, %p80
    %p82 = scmp.ne.s32.totalorder %s68, %s69
    %p83 = scmp.eq.s32.totalorder %s14, 1
    %p84 = por %p82, %p83
    %p86 = scmp.ne.s32.totalorder %s69, %s85
    %p87 = scmp.eq.s32.totalorder %s14, 0
    %p88 = por %p86, %p87
    %p89 = scmp.le.s32.totalorder 1, %s8
    %p90 = scmp.lt.s32.totalorder %s8, 3
    %p91 = pnand %p89, %p90
    %p92 = pneg %p91
    // Predicated region
    $region9: #{tpu_custom_call.1} parent=5 // pred_check
      _
    $region10: #{tpu_custom_call.1} parent=5 // pred_check_branch
      %94 = sbr.rel (%p91) target = $region12
    $region11: #{tpu_custom_call.1} parent=5 // pred_region
      %s95 = ssub.s32 %s8, 1
      // Predicated region
      $region13: #{tpu_custom_call.1} parent=11 // pred_check
        %p96 = pneg %p55
      $region14: #{tpu_custom_call.1} parent=11 // pred_check_branch
        %98 = sbr.rel (%p96) target = $region16
      $region15: #{tpu_custom_call.1} parent=11 // pred_region
        _
      $region16: #{tpu_custom_call.1} parent=11 // pred_fallthru
        _
    $region12: #{tpu_custom_call.1} parent=5 // pred_fallthru
      _
    %p99 = scmp.lt.s32.totalorder %s8, 2
    // Predicated region
    $region17: #{tpu_custom_call.1} parent=5 // pred_check
      %p100 = pneg %p99
    $region18: #{tpu_custom_call.1} parent=5 // pred_check_branch
      %102 = sbr.rel (%p100) target = $region20
    $region19: #{tpu_custom_call.1} parent=5 // pred_region
      // Predicated region
      $region21: #{tpu_custom_call.1} parent=19 // pred_check
        %p103 = pneg %p28
      $region22: #{tpu_custom_call.1} parent=19 // pred_check_branch
        %105 = sbr.rel (%p103) target = $region24
      $region23: #{tpu_custom_call.1} parent=19 // pred_region
        %s106 = smul.u32 8, %s8
        %p107 = scmp.lt.s32.totalorder %s106, 15
        %s108 = scalar_select %p107, %s106, 15
        %s109 = smul.addr %s108, 8
        %s110 = scalar_lea.vmem %s0, %s109
        %s111 = smul.u32 8, %s8
      $region24: #{tpu_custom_call.1} parent=19 // pred_fallthru
        _
    $region20: #{tpu_custom_call.1} parent=5 // pred_fallthru
      _
    %p112 = scmp.le.s32.totalorder 1, %s8
    %p113 = scmp.lt.s32.totalorder %s8, 3
    %p114 = pnand %p112, %p113
    %p115 = pneg %p114
    // Predicated region
    $region25: #{tpu_custom_call.1} parent=5 // pred_check
      _
    $region26: #{tpu_custom_call.1} parent=5 // pred_check_branch
      %117 = sbr.rel (%p114) target = $region28
    $region27: #{tpu_custom_call.1} parent=5 // pred_region
      %s118 = ssub.s32 %s8, 1
      %s119 = smul.u32 8, %s13
      %p120 = scmp.lt.s32.totalorder %s119, 15
      %s121 = scalar_select %p120, %s119, 15
      %s122 = smul.addr %s121, 8
      %s123 = scalar_lea.vmem %s0, %s122
      %p124 = pneg %p34
      %p125 = pneg %p31
      %p126 = pneg %p55
      %p127 = pneg %p52
      %p128 = pneg %p81
      %p129 = pneg %p78
      %s130 = smul.u32 8, %s13
      %p131 = scmp.lt.s32.totalorder %s130, 15
      %s132 = scalar_select %p131, %s130, 15
      %s133 = smul.addr %s132, 8
      %s134 = scalar_lea.vmem %s2, %s133
      %s135 = smul.u32 8, %s13
      %p136 = scmp.lt.s32.totalorder %s135, 15
      %s137 = scalar_select %p136, %s135, 15
      %s138 = smul.addr %s137, 8
      %s139 = scalar_lea.vmem %s0, %s138
      %s140 = smul.u32 8, %s13
      %s141 = smul.u32 8, %s13
      %p142 = scmp.lt.s32.totalorder %s141, 15
      %s143 = scalar_select %p142, %s141, 15
      %s144 = smul.addr %s143, 8
      %s145 = scalar_lea.vmem %s2, %s144
      %s146 = smul.u32 8, %s13
      %v147 = vld [vmem:[%s139] sm:$0xff]
      %v148 = vld [vmem:[%s139 + $0x8] sm:$0xff]
      %v149 = vld [vmem:[%s139 + $0x10] sm:$0xff]
      %v150 = vld [vmem:[%s139 + $0x18] sm:$0xff]
      %v151 = vld [vmem:[%s139 + $0x20] sm:$0xff]
      %v152 = vld [vmem:[%s139 + $0x28] sm:$0xff]
      %v153 = vld [vmem:[%s139 + $0x30] sm:$0xff]
      %v154 = vld [vmem:[%s139 + $0x38] sm:$0xff]
      %v155 = vld [vmem:[%s1] sm:$0xff]
      %v156 = vld [vmem:[%s1 + $0x8] sm:$0xff]
      %vm157 = vcmask 130048
      %v159 = vsel %vm157, %v147, 0
      %v162 = vsel %vm157, %v148, 0
      %v165 = vsel %vm157, %v149, 0
      %v168 = vsel %vm157, %v150, 0
      %v171 = vsel %vm157, %v151, 0
      %v174 = vsel %vm157, %v152, 0
      %v177 = vsel %vm157, %v153, 0
      %v180 = vsel %vm157, %v154, 0
      %182 = vmatprep.subr.mxu0 0.0
      %183 = vmatpush1.msra.mxu0 0.0
      %184 = vmatprep.subr.mxu0 0.0
      %185 = vmatpush1.msra.mxu0 0.0
      %186 = vmatprep.subr.mxu0 0.0
      %187 = vmatpush1.msra.mxu0 0.0
      %188 = vmatprep.subr.mxu0 0.0
      %189 = vmatpush1.msra.mxu0 0.0
      %190 = vmatprep.subr.mxu0 0.0
      %191 = vmatpush1.msra.mxu0 0.0
      %192 = vmatprep.subr.mxu0 0.0
      %193 = vmatpush1.msra.mxu0 0.0
      %194 = vmatprep.subr.mxu0 0.0
      %195 = vmatpush1.msra.mxu0 0.0
      %196 = vmatprep.subr.mxu0 0.0
      %197 = vmatpush1.msra.mxu0 0.0
      %198 = vmatprep.subr.mxu0 0.0
      %199 = vmatpush1.msra.mxu0 0.0
      %200 = vmatprep.subr.mxu0 0.0
      %201 = vmatpush1.msra.mxu0 0.0
      %202 = vmatprep.subr.mxu0 0.0
      %203 = vmatpush1.msra.mxu0 0.0
      %204 = vmatprep.subr.mxu0 0.0
      %205 = vmatpush1.msra.mxu0 0.0
      %206 = vmatprep.subr.mxu0 0.0
      %207 = vmatpush1.msra.mxu0 0.0
      %208 = vmatprep.subr.mxu0 0.0
      %209 = vmatpush1.msra.mxu0 0.0
      %210 = vmatprep.subr.mxu0 0.0
      %211 = vmatpush1.msra.mxu0 %v156
      %212 = vmatprep.subr.mxu0 0.0
      %213 = vmatpush1.msra.mxu0 %v155
      %214 = vmatprep.subr.mxu0 0.0
      %215 = vmatpush2.msra.mxu0 0.0
      %216 = vmatprep.subr.mxu0 0.0
      %217 = vmatpush2.msra.mxu0 0.0
      %218 = vmatprep.subr.mxu0 0.0
      %219 = vmatpush2.msra.mxu0 0.0
      %220 = vmatprep.subr.mxu0 0.0
      %221 = vmatpush2.msra.mxu0 0.0
      %222 = vmatprep.subr.mxu0 0.0
      %223 = vmatpush2.msra.mxu0 0.0
      %224 = vmatprep.subr.mxu0 0.0
      %225 = vmatpush2.msra.mxu0 0.0
      %226 = vmatprep.subr.mxu0 0.0
      %227 = vmatpush2.msra.mxu0 0.0
      %228 = vmatprep.subr.mxu0 0.0
      %229 = vmatpush2.msra.mxu0 0.0
      %230 = vmatprep.subr.mxu0 0.0
      %231 = vmatpush2.msra.mxu0 0.0
      %232 = vmatprep.subr.mxu0 0.0
      %233 = vmatpush2.msra.mxu0 0.0
      %234 = vmatprep.subr.mxu0 0.0
      %235 = vmatpush2.msra.mxu0 0.0
      %236 = vmatprep.subr.mxu0 0.0
      %237 = vmatpush2.msra.mxu0 0.0
      %238 = vmatprep.subr.mxu0 0.0
      %239 = vmatpush2.msra.mxu0 0.0
      %240 = vmatprep.subr.mxu0 0.0
      %241 = vmatpush2.msra.mxu0 0.0
      %242 = vmatprep.subr.mxu0 0.0
      %243 = vmatpush2.msra.mxu0 0.0
      %244 = vmatprep.subr.mxu0 0.0
      %245 = vmatpush2.msra.mxu0 0.0
      %246 = vmatprep.mubr.f32.mxu0 0.0
      %247 = vmatmul.mubr.f32.gmra.mxu0 %v159
      %v248 = vpop.f32.mrf.mxu0
      %v249 = vadd.f32 0.0, %v248
      %v250 = vpop.f32.mrf.mxu0
      %251 = vmatprep.mubr.f32.mxu0 0.0
      %252 = vmatmul.mubr.f32.gmra.mxu0 %v162
      %v253 = vpop.f32.mrf.mxu0
      %v254 = vadd.f32 0.0, %v253
      %v255 = vpop.f32.mrf.mxu0
      %256 = vmatprep.mubr.f32.mxu0 0.0
      %257 = vmatmul.mubr.f32.gmra.mxu0 %v165
      %v258 = vpop.f32.mrf.mxu0
      %v259 = vadd.f32 0.0, %v258
      %v260 = vpop.f32.mrf.mxu0
      %261 = vmatprep.mubr.f32.mxu0 0.0
      %262 = vmatmul.mubr.f32.gmra.mxu0 %v168
      %v263 = vpop.f32.mrf.mxu0
      %v264 = vadd.f32 0.0, %v263
      %v265 = vpop.f32.mrf.mxu0
      %266 = vmatprep.mubr.f32.mxu0 0.0
      %267 = vmatmul.mubr.f32.gmra.mxu0 %v171
      %v268 = vpop.f32.mrf.mxu0
      %v269 = vadd.f32 0.0, %v268
      %v270 = vpop.f32.mrf.mxu0
      %271 = vmatprep.mubr.f32.mxu0 0.0
      %272 = vmatmul.mubr.f32.gmra.mxu0 %v174
      %v273 = vpop.f32.mrf.mxu0
      %v274 = vadd.f32 0.0, %v273
      %v275 = vpop.f32.mrf.mxu0
      %276 = vmatprep.mubr.f32.mxu0 0.0
      %277 = vmatmul.mubr.f32.gmra.mxu0 %v177
      %v278 = vpop.f32.mrf.mxu0
      %v279 = vadd.f32 0.0, %v278
      %v280 = vpop.f32.mrf.mxu0
      %281 = vmatprep.mubr.f32.mxu0 0.0
      %282 = vmatmul.mubr.f32.gmra.mxu0 %v180
      %v283 = vpop.f32.mrf.mxu0
      %v284 = vadd.f32 0.0, %v283
      %v285 = vpop.f32.mrf.mxu0
      %286 = vdwg.mxu0
      %vm287 = vcmask 523264
      %288 = vst.msk [vmem:[%s145] sm:$0xff] %vm287, %v249
      %289 = vst.msk [vmem:[%s145 + $0x8] sm:$0xff] %vm287, %v254
      %290 = vst.msk [vmem:[%s145 + $0x10] sm:$0xff] %vm287, %v259
      %291 = vst.msk [vmem:[%s145 + $0x18] sm:$0xff] %vm287, %v264
      %292 = vst.msk [vmem:[%s145 + $0x20] sm:$0xff] %vm287, %v269
      %293 = vst.msk [vmem:[%s145 + $0x28] sm:$0xff] %vm287, %v274
      %294 = vst.msk [vmem:[%s145 + $0x30] sm:$0xff] %vm287, %v279
      %295 = vst.msk [vmem:[%s145 + $0x38] sm:$0xff] %vm287, %v284
      %s296 = smul.u32 8, %s13
      %p297 = scmp.lt.s32.totalorder %s296, 15
      %s298 = scalar_select %p297, %s296, 15
      %s299 = smul.addr %s298, 8
      %s300 = scalar_lea.vmem %s2, %s299
      // Predicated region
      $region29: #{tpu_custom_call.1} parent=27 // pred_check
        %p301 = pneg %p78
      $region30: #{tpu_custom_call.1} parent=27 // pred_check_branch
        %303 = sbr.rel (%p301) target = $region32
      $region31: #{tpu_custom_call.1} parent=27 // pred_region
        %s304 = smul.u32 8, %s13
      $region32: #{tpu_custom_call.1} parent=27 // pred_fallthru
        _
    $region28: #{tpu_custom_call.1} parent=5 // pred_fallthru
      _
    %p305 = scmp.le.s32.totalorder 2, %s8
    // Predicated region
    $region33: #{tpu_custom_call.1} parent=5 // pred_check
      %p306 = pneg %p305
    $region34: #{tpu_custom_call.1} parent=5 // pred_check_branch
      %308 = sbr.rel (%p306) target = $region36
    $region35: #{tpu_custom_call.1} parent=5 // pred_region
      %s309 = ssub.s32 %s8, 2
      // Predicated region
      $region37: #{tpu_custom_call.1} parent=35 // pred_check
        %p310 = pneg %p84
      $region38: #{tpu_custom_call.1} parent=35 // pred_check_branch
        %312 = sbr.rel (%p310) target = $region40
      $region39: #{tpu_custom_call.1} parent=35 // pred_region
        %s313 = smul.u32 8, %s14
        %p314 = scmp.lt.s32.totalorder %s313, 15
        %s315 = scalar_select %p314, %s313, 15
        %s316 = smul.addr %s315, 8
        %s317 = scalar_lea.vmem %s2, %s316
      $region40: #{tpu_custom_call.1} parent=35 // pred_fallthru
        _
    $region36: #{tpu_custom_call.1} parent=5 // pred_fallthru
      _
  $region6: #{tpu_custom_call.1} parent=0 // loop_footer
    %s12 = sadd.s32 1, %s8
  $region7: #{tpu_custom_call.1} parent=0 // loop_footer_branch
    %7 = sbr.rel target = $region3
  $region8: #{tpu_custom_call.1} parent=0 // loop_exit
    _

</llo_original>
